<compile_context>
chip_gen: v6e
topology: v6e:2x2x1
jax: 0.10.0
libtpu: 0.0.40
codegen_flags: <defaults>
</compile_context>

<pallas_src>
import functools

import numpy as np

import jax
import jax.numpy as jnp
from jax.experimental import pallas as pl
from jax.experimental.pallas import tpu as pltpu

_LANE = 128
_SUBLANE = 8
_MAX_ROW_TILE = 512      # output-row tile cap for the matmul kernels
_MAX_K_TILE = 512        # contraction (source-row) tile cap; multiple of 128


def _round_up(a, b):
    return ((a + b - 1) // b) * b


@functools.lru_cache(maxsize=None)
def _vmem_limit_bytes():
    """Generation-aware VMEM budget: ~3/4 of physical (v5e/v6e ~96 MiB, v7x 48 MiB)."""
    try:
        cap = getattr(pltpu.get_tpu_info(), "vmem_capacity_bytes", None)
        if cap:
            return int(min(max((cap * 3) // 4, 32 * 1024 * 1024), 112 * 1024 * 1024))
    except Exception:
        pass
    return 48 * 1024 * 1024   # safe default on every current generation


# --------------------- bilinear (align_corners=False) ops -------------------

def _src_index(out_size, in_size):
    """PyTorch F.interpolate bilinear (align_corners=False) source indices/weights."""
    scale = in_size / out_size
    s = scale * (np.arange(out_size, dtype=np.float64) + 0.5) - 0.5
    s = np.maximum(s, 0.0)                       # torch clamps negatives for bilinear
    i0 = np.minimum(np.floor(s), in_size - 1).astype(np.int64)
    i1 = np.minimum(i0 + 1, in_size - 1)
    w1 = (s - i0).astype(np.float32)
    return i0, i1, w1


def _interp_matrix(out_size, in_size):
    """Dense (out_size, in_size) matrix M such that resized = M @ signal."""
    i0, i1, w1 = _src_index(out_size, in_size)
    m = np.zeros((out_size, in_size), dtype=np.float32)
    r = np.arange(out_size)
    m[r, i0] += (1.0 - w1)
    m[r, i1] += w1
    return m


# ----------------------- identity-resize level (mem-bound) ------------------

def _identity_kernel(x_ref, d_ref, out_ref, *, n_rows, tile_h):
    diff = x_ref[...] - d_ref[...]
    if n_rows % tile_h:                       # ragged last tile -> mask OOB rows
        row = (pl.program_id(0) * tile_h
               + jax.lax.broadcasted_iota(jnp.int32, diff.shape, 0))
        diff = jnp.where(row < n_rows, diff, 0.0)
    out_ref[0] = jnp.sum(diff * diff, axis=0, keepdims=True)


def _identity_level_sq_sum(x2, d2):
    """sum((x - do)**2) for levels whose resize is the identity (no MXU work).

    Inputs stay f32 (casting to bf16 in the wrapper would add an extra HBM pass
    for this purely mem-bound op)."""
    H, WC = x2.shape
    if H <= _SUBLANE:
        tile_h, n_t = H, 1
    else:
        budget = _vmem_limit_bytes() // 8     # per input buffer (2 inputs x 2 bufs)
        cap = max(_SUBLANE, (budget // (WC * 4)) // _SUBLANE * _SUBLANE)
        tile_h = max(_SUBLANE, min((H // _SUBLANE) * _SUBLANE, cap))
        n_t = pl.cdiv(H, tile_h)

    partials = pl.pallas_call(
        functools.partial(_identity_kernel, n_rows=H, tile_h=tile_h),
        out_shape=jax.ShapeDtypeStruct((n_t, 1, WC), jnp.float32),
        grid=(n_t,),
        in_specs=[pl.BlockSpec((tile_h, WC), lambda t: (t, 0)),
                  pl.BlockSpec((tile_h, WC), lambda t: (t, 0))],
        out_specs=pl.BlockSpec((1, 1, WC), lambda t: (t, 0, 0)),
        compiler_params=pltpu.CompilerParams(
            dimension_semantics=("parallel",),
            vmem_limit_bytes=_vmem_limit_bytes()),
    )(x2, d2)
    return jnp.sum(partials)


# --------------------- row-resize + diff + squared sum (MXU) ----------------

def _resize_diff_sq_kernel(*refs, n_chains):
    """Accumulate sum_i sign_i * (R_i tile) @ (M_i k-block) over the k axis,
    then square + lane-partial-sum at the last k step."""
    r_refs = refs[:n_chains]
    m_refs = refs[n_chains:2 * n_chains]
    out_ref = refs[2 * n_chains]
    acc_ref = refs[2 * n_chains + 1]

    k = pl.program_id(1)

    @pl.when(k == 0)
    def _():
        acc_ref[...] = jnp.zeros_like(acc_ref)

    part = jnp.dot(r_refs[0][...], m_refs[0][...],
                   preferred_element_type=jnp.float32)
    for i in range(1, n_chains):
        part -= jnp.dot(r_refs[i][...], m_refs[i][...],
                        preferred_element_type=jnp.float32)
    acc_ref[...] += part

    @pl.when(k == pl.num_programs(1) - 1)
    def _():
        y = acc_ref[...]
        out_ref[0] = jnp.sum(y * y, axis=0, keepdims=True)


def _resize_sq_sum(chains, rows, cols, C):
    """sum over ((R_0 @ M_0) - (R_1 @ M_1) - ...)**2.

    chains: list of (rmat: np.ndarray (rows, H_i), m: jnp f32 (H_i, cols*C)).
    The column resize has already been hoisted into every `m`; this kernel does
    the row-resize matmuls (bf16 operands, f32 accumulation), the difference,
    and the squared reduction.  Zero padding (rows / contraction / lanes)
    contributes exactly zero to the result.
    """
    n = len(chains)
    cc = cols * C
    ccp = _round_up(cc, _LANE)
    limit = _vmem_limit_bytes()

    # --- contraction (source-row) tiling: inner "arbitrary" grid axis -------
    k_max = max(rm.shape[1] for rm, _ in chains)
    # keep the double-buffered bf16 column blocks within ~half of VMEM
    k_cap_vmem = max(_LANE, ((limit // 2) // (n * ccp * 4)) // _LANE * _LANE)
    k_cap = min(_MAX_K_TILE, k_cap_vmem)
    kp0 = _round_up(k_max, _SUBLANE)
    if kp0 <= k_cap:
        tile_k, kp = kp0, kp0
    else:
        tile_k = k_cap                        # multiple of 128 -> legal sub-block
        kp = _round_up(k_max, tile_k)
    k_tiles = kp // tile_k

    # --- output-row tiling: outer "parallel" grid axis ----------------------
    # >=2 balanced tiles so dual-TensorCore chips (v7x) shard the work; the
    # extra grid step costs ~0.35us on single-core v5e/v6e.
    r_cap_vmem = max(_SUBLANE, ((limit // 4) // (ccp * 4)) // _SUBLANE * _SUBLANE)
    max_row_tile = min(_MAX_ROW_TILE, r_cap_vmem)
    rows8 = _round_up(rows, _SUBLANE)
    if rows8 <= _SUBLANE:
        tile_r, n_row_tiles = rows8, 1
    else:
        n_row_tiles = max(2, pl.cdiv(rows8, max_row_tile))
        tile_r = _round_up(pl.cdiv(rows8, n_row_tiles), _SUBLANE)
        n_row_tiles = pl.cdiv(rows8, tile_r)
    rows_pad = tile_r * n_row_tiles

    # --- padded bf16 operands -----------------------------------------------
    r_in, m_in = [], []
    for rmat, m in chains:
        h_i = rmat.shape[1]
        r_p = np.zeros((rows_pad, kp), np.float32)
        r_p[:rows, :h_i] = rmat
        r_in.append(jnp.asarray(r_p, jnp.bfloat16))
        m_in.append(jnp.pad(m, ((0, kp - h_i), (0, ccp - cc))).astype(jnp.bfloat16))

    in_specs = (
        [pl.BlockSpec((tile_r, tile_k), lambda t, k: (t, k)) for _ in range(n)]
        + [pl.BlockSpec((tile_k, ccp), lambda t, k: (k, 0)) for _ in range(n)])
    # TODO(synk): for extreme widths where a single (tile_k, cols*C) bf16 block
    # alone exceeds VMEM the lane dimension would also need tiling.

    partials = pl.pallas_call(
        functools.partial(_resize_diff_sq_kernel, n_chains=n),
        out_shape=jax.ShapeDtypeStruct((n_row_tiles, 1, ccp), jnp.float32),
        grid=(n_row_tiles, k_tiles),
        in_specs=in_specs,
        out_specs=pl.BlockSpec((1, 1, ccp), lambda t, k: (t, 0, 0)),
        scratch_shapes=[pltpu.VMEM((tile_r, ccp), jnp.float32)],
        compiler_params=pltpu.CompilerParams(
            dimension_semantics=("parallel", "arbitrary"),
            vmem_limit_bytes=limit),
    )(*r_in, *m_in)
    return jnp.sum(partials)


# -------------------------------- MSR loss ----------------------------------

def _msr_layer(x32, d32, rows, cols):
    H, W, C = x32.shape
    Hd, Wd, Cd = d32.shape
    if C != Cd:
        raise ValueError("x and decoder output must have the same channel count")

    if rows == H == Hd and cols == W == Wd:
        # Identity resize on both tensors: skip the MXU entirely (mem-bound).
        ssq = _identity_level_sq_sum(x32.reshape(H, W * C),
                                     d32.reshape(Hd, Wd * C))
    elif (H, W) == (Hd, Wd):
        # Same spatial shape: resize(x) - resize(do) == resize(x - do); one chain.
        cmat = jnp.asarray(_interp_matrix(cols, W))
        mc = jnp.einsum('cw,hwk->hck', cmat, x32 - d32).reshape(H, cols * C)
        ssq = _resize_sq_sum([(_interp_matrix(rows, H), mc)], rows, cols, C)
    else:
        # General case: two chains; diff + reduction fused in-kernel.
        xc = jnp.einsum('cw,hwk->hck', jnp.asarray(_interp_matrix(cols, W)),
                        x32).reshape(H, cols * C)
        dc = jnp.einsum('cw,hwk->hck', jnp.asarray(_interp_matrix(cols, Wd)),
                        d32).reshape(Hd, cols * C)
        ssq = _resize_sq_sum([(_interp_matrix(rows, H), xc),
                              (_interp_matrix(rows, Hd), dc)], rows, cols, C)
    return ssq / float(rows * cols)


def msr_loss(x, decoder_outputs):
    """MSRLoss.forward(x=x, y=decoder_outputs) -> scalar loss."""
    x32 = jnp.asarray(x, jnp.float32)
    scale = 1
    layers = []
    for do in decoder_outputs:
        rows = do.shape[0] // scale
        cols = do.shape[1] // scale
        if rows < 1 or cols < 1:
            raise ValueError(
                f"decoder output {tuple(do.shape)} too small for scale {scale}: "
                "F.interpolate would fail on a zero-sized target")
        layers.append(_msr_layer(x32, jnp.asarray(do, jnp.float32), rows, cols))
        scale *= 2
    return jnp.stack(layers).mean()           # single stacked reduction


# ----------------------------- pure-JAX reference ---------------------------

def _resize_bilinear_ref(img, rows, cols):
    """Gather-based bilinear resize matching F.interpolate(align_corners=False)."""
    H, W, _ = img.shape
    r0, r1, wr = _src_index(rows, H)
    c0, c1, wc = _src_index(cols, W)
    img = jnp.asarray(img, jnp.float32)
    wr = jnp.asarray(wr)[:, None, None]
    wc = jnp.asarray(wc)[None, :, None]
    top = img[r0][:, c0] * (1.0 - wc) + img[r0][:, c1] * wc
    bot = img[r1][:, c0] * (1.0 - wc) + img[r1][:, c1] * wc
    return top * (1.0 - wr) + bot * wr


def msr_loss_ref(x, decoder_outputs):
    scale = 1
    layers = []
    for do in decoder_outputs:
        rows = do.shape[0] // scale
        cols = do.shape[1] // scale
        xr = _resize_bilinear_ref(x, rows, cols)
        dr = _resize_bilinear_ref(do, rows, cols)
        layers.append(jnp.sum((xr - dr) ** 2) / (rows * cols))
        scale *= 2
    return sum(layers) / len(layers)


if __name__ == "__main__":
    key = jax.random.PRNGKey(0)
    kx, k0, k1, k2 = jax.random.split(key, 4)
    H, W, C = 32, 32, 4
    x = jax.random.normal(kx, (H, W, C), dtype=jnp.float32)
    decoder_outputs = [
        jax.random.normal(k0, (32, 32, C), dtype=jnp.float32),  # scale 1 -> (32,32): identity path
        jax.random.normal(k1, (32, 32, C), dtype=jnp.float32),  # scale 2 -> (16,16): fused same-shape path
        jax.random.normal(k2, (24, 40, C), dtype=jnp.float32),  # scale 4 -> (6,10) : general two-chain path
    ]

    loss = jax.block_until_ready(msr_loss(x, decoder_outputs))
    loss_ref = jax.block_until_ready(msr_loss_ref(x, decoder_outputs))

    assert loss.shape == ()
    assert bool(jnp.isfinite(loss))
    # bf16 MXU operands (f32 accumulation) -> slightly looser tolerance.
    assert jnp.allclose(loss, loss_ref, rtol=2e-2, atol=2e-3), (loss, loss_ref)
    print("KERNEL_OK")
</pallas_src>

<mosaic_0001>
module attributes {stable_mosaic.version = 11 : i64} {
  func.func @_identity_kernel(%arg0: i32, %arg1: memref<32x128xf32, #tpu.memory_space<vmem>>, %arg2: memref<32x128xf32, #tpu.memory_space<vmem>>, %arg3: memref<1x1x128xf32, #tpu.memory_space<vmem>>) attributes {dimension_semantics = [#tpu.dimension_semantics<parallel>], iteration_bounds = array<i64: 1>, scalar_prefetch = 0 : i64, scratch_operands = 0 : i64, tpu.core_type = #tpu.core_type<tc>, window_params = [{transform_indices = @transform_0, window_bounds = array<i64: 32, 128>}, {transform_indices = @transform_1, window_bounds = array<i64: 32, 128>}, {transform_indices = @transform_2, window_bounds = array<i64: 1, 1, 128>}]} {
    %c0 = arith.constant 0 : index
    %c0_0 = arith.constant 0 : index
    %0 = vector.load %arg1[%c0, %c0_0] : memref<32x128xf32, #tpu.memory_space<vmem>>, vector<32x128xf32>
    %c0_1 = arith.constant 0 : index
    %c0_2 = arith.constant 0 : index
    %1 = vector.load %arg2[%c0_1, %c0_2] : memref<32x128xf32, #tpu.memory_space<vmem>>, vector<32x128xf32>
    %2 = arith.subf %0, %1 : vector<32x128xf32>
    %3 = arith.mulf %2, %2 : vector<32x128xf32>
    %cst = arith.constant dense<0.000000e+00> : vector<128xf32>
    %4 = vector.multi_reduction <add>, %3, %cst [0] : vector<32x128xf32> to vector<128xf32>
    %5 = vector.shape_cast %4 : vector<128xf32> to vector<1x128xf32>
    %c0_3 = arith.constant 0 : index
    %c0_4 = arith.constant 0 : index
    %c0_5 = arith.constant 0 : index
    %6 = vector.load %arg3[%c0_3, %c0_4, %c0_5] : memref<1x1x128xf32, #tpu.memory_space<vmem>>, vector<1x1x128xf32>
    %7 = vector.shape_cast %6 : vector<1x1x128xf32> to vector<1x128xf32>
    %8 = vector.shape_cast %5 : vector<1x128xf32> to vector<1x1x128xf32>
    tpu.vector_store %arg3[%c0_3, %c0_4, %c0_5], %8 {strides = array<i32>} : memref<1x1x128xf32, #tpu.memory_space<vmem>>, vector<1x1x128xf32>,
    return
  }
  func.func @transform_0(%arg0: i32) -> (i32, i32) {
    %c0_i32 = arith.constant 0 : i32
    %c0_i32_0 = arith.constant 0 : i32
    return %arg0, %c0_i32 : i32, i32
  }
  func.func @transform_1(%arg0: i32) -> (i32, i32) {
    %c0_i32 = arith.constant 0 : i32
    %c0_i32_0 = arith.constant 0 : i32
    return %arg0, %c0_i32 : i32, i32
  }
  func.func @transform_2(%arg0: i32) -> (i32, i32, i32) {
    %c0_i32 = arith.constant 0 : i32
    %c0_i32_0 = arith.constant 0 : i32
    %c0_i32_1 = arith.constant 0 : i32
    return %arg0, %c0_i32, %c0_i32_0 : i32, i32, i32
  }
}

</mosaic_0001>

<llo_original>
// kernel: tpu_custom_call.1
$region0: #{tpu_custom_call.1}
  #allocation0 [shape = 'u32[]', space=smem, size = 0x4, offset = 0x4, fixed_abs, tag = 'smem constant byte address 0x4 - core index']
  #allocation1 [shape = 'u32[144,128]{1,0:T(1,128)}', space=vmem, size = 0x12000, scoped, tag = 'internal scratch']
  %s0 = inlined_call_operand.hbm [shape: f32[32,128], index: 0, kind: input, shape index: {}]
  %s1 = inlined_call_operand.hbm [shape: f32[32,128], index: 1, kind: input, shape index: {}]
  %s2 = inlined_call_operand.hbm [shape: f32[1,1,128], index: 2, kind: output, shape index: {}]
  %s3 = sld [smem:[#allocation0]]
  $region26: #{tpu_custom_call.1} parent=0
    _
  %s5 = ssub.s32 1, %s3
  %s6 = scalar_select 0, %s5, %s3
  $region1: #{tpu_custom_call.1} parent=0
    #allocation2 [shape = 'u8[16384]{0}', space=vmem, size = 0x4000, scoped, tag = 'input window, operand 0, single buffered']
    #allocation3 [shape = 's32[1]{0}', space=sflag, size = 0x4, scoped, tag = 'scoped memory for tpu_custom_call.1']
    #allocation4 [shape = 's32[1]{0}', space=sflag, size = 0x4, scoped, tag = 'scoped memory for tpu_custom_call.1']
    #allocation5 [shape = 'u8[16384]{0}', space=vmem, size = 0x4000, scoped, tag = 'input window, operand 1, single buffered']
    #allocation6 [shape = 's32[1]{0}', space=sflag, size = 0x4, scoped, tag = 'scoped memory for tpu_custom_call.1']
    #allocation7 [shape = 'u8[512]{0}', space=vmem, size = 0x400, scoped, tag = 'output window, operand 0, single buffered']
    %7 = vsyncpa [#allocation3], 0
    %8 = vsyncpa [#allocation6], 0
    %9 = vsyncpa [#allocation4], 0
    // Predicated region
    $region2: #{tpu_custom_call.1} parent=1 // pred_check
      _
    $region3: #{tpu_custom_call.1} parent=1 // pred_check_branch
      %11 = sbr.rel (0) target = $region5
    $region4: #{tpu_custom_call.1} parent=1 // pred_region
      %s13 = ssub.s32 512, 512
      %14 = vsyncadd [#allocation3], %s13
      %s15 = sshll.u32 [#allocation2], 4
      %s16 = int_to_ptr.vmem [resolvable:$true] %s15
      %21 = dma.hbm_to_vmem [thread:$0]  %s0, 512, %s16, [#allocation3], 128, 128, 8
    $region5: #{tpu_custom_call.1} parent=1 // pred_fallthru
      _
    // Predicated region
    $region6: #{tpu_custom_call.1} parent=1 // pred_check
      _
    $region7: #{tpu_custom_call.1} parent=1 // pred_check_branch
      %23 = sbr.rel (0) target = $region9
    $region8: #{tpu_custom_call.1} parent=1 // pred_region
      %s25 = ssub.s32 512, 512
      %26 = vsyncadd [#allocation6], %s25
      %s27 = sshll.u32 [#allocation5], 4
      %s28 = int_to_ptr.vmem [resolvable:$true] %s27
      %33 = dma.hbm_to_vmem [thread:$0]  %s1, 512, %s28, [#allocation6], 128, 128, 8
    $region9: #{tpu_custom_call.1} parent=1 // pred_fallthru
      _
    // Predicated region
    $region10: #{tpu_custom_call.1} parent=1 // pred_check
      _
    $region11: #{tpu_custom_call.1} parent=1 // pred_check_branch
      %35 = sbr.rel (0) target = $region13
    $region12: #{tpu_custom_call.1} parent=1 // pred_region
      %36 = dma.done [#allocation3], 512
    $region13: #{tpu_custom_call.1} parent=1 // pred_fallthru
      _
    // Predicated region
    $region14: #{tpu_custom_call.1} parent=1 // pred_check
      _
    $region15: #{tpu_custom_call.1} parent=1 // pred_check_branch
      %38 = sbr.rel (0) target = $region17
    $region16: #{tpu_custom_call.1} parent=1 // pred_region
      %39 = dma.done [#allocation6], 512
    $region17: #{tpu_custom_call.1} parent=1 // pred_fallthru
      _
    %v40 = vld [vmem:[#allocation2] sm:$0xff]
    %v41 = vld [vmem:[#allocation2 + $0x8] sm:$0xff]
    %v42 = vld [vmem:[#allocation2 + $0x10] sm:$0xff]
    %v43 = vld [vmem:[#allocation2 + $0x18] sm:$0xff]
    %v44 = vld [vmem:[#allocation5] sm:$0xff]
    %v45 = vld [vmem:[#allocation5 + $0x8] sm:$0xff]
    %v46 = vld [vmem:[#allocation5 + $0x10] sm:$0xff]
    %v47 = vld [vmem:[#allocation5 + $0x18] sm:$0xff]
    %v48 = vsub.f32 %v40, %v44
    %v49 = vsub.f32 %v41, %v45
    %v50 = vsub.f32 %v42, %v46
    %v51 = vsub.f32 %v43, %v47
    %v52 = vmul.f32 %v48, %v48
    %v53 = vmul.f32 %v49, %v49
    %v54 = vmul.f32 %v50, %v50
    %v55 = vmul.f32 %v51, %v51
    %v56 = vadd.f32 %v52, %v53
    %v57 = vadd.f32 %v56, %v54
    %v58 = vadd.f32 %v57, %v55
    %v59 = vrot.slane %v58, 4
    %v60 = vadd.f32 %v58, %v59
    %v61 = vrot.slane %v60, 2
    %v62 = vadd.f32 %v60, %v61
    %v63 = vrot.slane %v62, 1
    %v64 = vadd.f32 %v62, %v63
    %65 = vst [vmem:[#allocation7] sm:$0x1] %v64
    // Predicated region
    $region18: #{tpu_custom_call.1} parent=1 // pred_check
      _
    $region19: #{tpu_custom_call.1} parent=1 // pred_check_branch
      %67 = sbr.rel (0) target = $region21
    $region20: #{tpu_custom_call.1} parent=1 // pred_region
      %s69 = ssub.s32 16, 16
      %70 = vsyncadd [#allocation4], %s69
      %s72 = sshll.u32 [#allocation7], 4
      %s73 = int_to_ptr.vmem [resolvable:$true] %s72
      %75 = dma.vmem_to_hbm [thread:$0]  %s73, 16, %s2, [#allocation4]
    $region21: #{tpu_custom_call.1} parent=1 // pred_fallthru
      _
    // Predicated region
    $region22: #{tpu_custom_call.1} parent=1 // pred_check
      _
    $region23: #{tpu_custom_call.1} parent=1 // pred_check_branch
      %77 = sbr.rel (0) target = $region25
    $region24: #{tpu_custom_call.1} parent=1 // pred_region
      %78 = dma.done [#allocation4], 16
    $region25: #{tpu_custom_call.1} parent=1 // pred_fallthru
      _
    %79 = vsyncpa [#allocation3], 1
    %80 = vsyncpa [#allocation6], 1
    %81 = vsyncpa [#allocation4], 1

</llo_original>
